<compile_context>
chip_gen: v5e
topology: v5e:2x2
jax: 0.10.0
libtpu: 0.0.40
codegen_flags: <defaults>
</compile_context>

<pallas_src>
import jax
import jax.numpy as jnp
from jax.experimental import pallas as pl
from jax.experimental.pallas import tpu as pltpu


def _clas_head_kernel(h_ref, m_ref, w_ref, b_ref, logits_ref, probs_ref,
                      acc_ref, msum_ref):
    """Grid = (batch blocks, sequence chunks); sequence axis is the reduction.

    h_ref:      (TB, TS, H)  bf16/f32  encoder last-hidden-state chunk
    m_ref:      (TB, TS)     f32       attention mask chunk (lane-dense; may hold -1)
    w_ref:      (H, Lp)      f32       classifier weight (L padded to 128 lanes)
    b_ref:      (1, Lp)      f32       classifier bias (-1e30 in padded lanes)
    logits_ref: (TB, Lp)     f32       raw classifier output
    probs_ref:  (TB, Lp)     f32       softmax(logits, dim=-1)
    acc_ref:    (TB, H)      f32       running sum of mask-weighted embeddings
    msum_ref:   (TB, 1)      f32       running sum of the clamped mask
    """
    s = pl.program_id(1)

    @pl.when(s == 0)
    def _():
        acc_ref[...] = jnp.zeros_like(acc_ref)
        msum_ref[...] = jnp.zeros_like(msum_ref)

    # "modify - mask from -1 to 0": input_mask_expanded[input_mask_expanded < 0] = 0
    m = m_ref[...]
    m = jnp.where(m < 0.0, 0.0, m)                          # (TB, TS)

    # Chunked f32 upcast: only (TB, TS, H) lives in VMEM, never (TB, S, H).
    h = h_ref[...].astype(jnp.float32)                      # (TB, TS, H)

    acc_ref[...] += jnp.sum(h * m[:, :, None], axis=1)      # (TB, H)
    msum_ref[...] += jnp.sum(m, axis=1, keepdims=True)      # (TB, 1)

    @pl.when(s == pl.num_programs(1) - 1)
    def _():
        # Mean pooling: sum_embeddings / clamp(sum_mask, 1e-9)
        pooled = acc_ref[...] / jnp.maximum(msum_ref[...], 1e-9)    # (TB, H)
        # TODO(synk): nn.Dropout(p) is identity in eval mode; training-time dropout not modeled.

        # Linear classifier on the MXU (lane-dense Lp-wide output).
        logits = jnp.dot(pooled, w_ref[...],
                         preferred_element_type=jnp.float32) + b_ref[...]
        logits_ref[...] = logits

        # softmax(reshaped_logit, dim=1); padded lanes hold -1e30 -> exp == 0.
        mx = jnp.max(logits, axis=-1, keepdims=True)
        e = jnp.exp(logits - mx)
        probs_ref[...] = e / jnp.sum(e, axis=-1, keepdims=True)


def _vmem_limit_bytes():
    """Generation-aware scoped-VMEM request (v5e/v6e: 128 MiB phys, v7x: 64 MiB)."""
    try:
        cap = int(pltpu.get_tpu_info().vmem_capacity_bytes)
    except Exception:
        cap = 64 * 1024 * 1024          # conservative fallback (v7x-sized)
    return int(min(cap * 3 // 4, 96 * 1024 * 1024))


def _choose_tiles(B, S, H, elt_bytes, vmem_limit):
    """Pick (tb, ts) so the per-step working set fits comfortably in VMEM.

    Bytes per hidden element alive per step:
      2x double-buffered input (elt) + f32 upcast + f32 masked product.
    """
    per_elem = 2 * elt_bytes + 8
    budget = int(vmem_limit * 0.55)     # headroom for weight, outputs, scratch, mask

    # Sequence chunk: cap at 256 sublanes, then shrink until even an 8-row
    # batch tile fits the budget (the old min-8-row overshoot is impossible).
    ts = min(S, 256)
    if ts < S:
        ts = max(8, (ts // 8) * 8)
    while ts > 8 and 8 * ts * H * per_elem > budget:
        ts = max(8, ((ts // 2) // 8) * 8)

    # Batch tile: as large as the budget allows, multiple of 8 when tiled.
    tb = budget // max(1, ts * H * per_elem)
    tb = max(8, (tb // 8) * 8)
    if tb >= B:
        tb = B
    # Keep >= 2 batch blocks whenever B permits so v7x's 2 TensorCores both work.
    if B >= 16 and tb > B // 2:
        tb = max(8, ((B // 2) // 8) * 8)
    return tb, ts


def clas_head(hidden, mask, weight, bias, *, tb=None, ts=None):
    """hidden: (B,S,H) bf16/f32, mask: (B,S), weight: (H,L) f32, bias: (L,) f32.
    Returns (logits, probs), each (B, L) float32."""
    B, S, H = hidden.shape
    L = weight.shape[1]
    elt = jnp.dtype(hidden.dtype).itemsize

    vmem_limit = _vmem_limit_bytes()
    auto_tb, auto_ts = _choose_tiles(B, S, H, elt, vmem_limit)
    if tb is None:
        tb = auto_tb
    if ts is None:
        ts = auto_ts
    tb = min(tb, B)
    ts = min(ts, S)

    Bp = pl.cdiv(B, tb) * tb
    Sp = pl.cdiv(S, ts) * ts
    Lp = pl.cdiv(L, 128) * 128          # lane-dense output stores

    if (Bp, Sp) != (B, S):
        hidden = jnp.pad(hidden, ((0, Bp - B), (0, Sp - S), (0, 0)))
        mask = jnp.pad(mask, ((0, Bp - B), (0, Sp - S)))
    mask = mask.astype(jnp.float32)

    w_p = jnp.zeros((H, Lp), jnp.float32).at[:, :L].set(weight.astype(jnp.float32))
    b_p = jnp.full((1, Lp), -1e30, jnp.float32).at[0, :L].set(bias.astype(jnp.float32))

    cost = pl.CostEstimate(
        flops=int(2 * Bp * Sp * H + 2 * Bp * H * Lp),
        transcendentals=int(Bp * Lp),
        bytes_accessed=int(Bp * Sp * H * elt + Bp * Sp * 4
                           + H * Lp * 4 + Lp * 4 + 2 * Bp * Lp * 4),
    )

    logits, probs = pl.pallas_call(
        _clas_head_kernel,
        out_shape=(jax.ShapeDtypeStruct((Bp, Lp), jnp.float32),
                   jax.ShapeDtypeStruct((Bp, Lp), jnp.float32)),
        grid_spec=pltpu.PrefetchScalarGridSpec(
            num_scalar_prefetch=0,
            grid=(Bp // tb, Sp // ts),
            in_specs=[
                pl.BlockSpec((tb, ts, H), lambda b, s: (b, s, 0)),  # hidden chunk
                pl.BlockSpec((tb, ts), lambda b, s: (b, s)),        # mask (lane-dense)
                pl.BlockSpec((H, Lp), lambda b, s: (0, 0)),         # weight (resident)
                pl.BlockSpec((1, Lp), lambda b, s: (0, 0)),         # bias   (resident)
            ],
            out_specs=[
                pl.BlockSpec((tb, Lp), lambda b, s: (b, 0)),
                pl.BlockSpec((tb, Lp), lambda b, s: (b, 0)),
            ],
            scratch_shapes=[
                pltpu.VMEM((tb, H), jnp.float32),   # pooled-sum accumulator
                pltpu.VMEM((tb, 1), jnp.float32),   # mask-sum accumulator
            ],
        ),
        compiler_params=pltpu.CompilerParams(
            dimension_semantics=("parallel", "arbitrary"),
            vmem_limit_bytes=vmem_limit,
        ),
        cost_estimate=cost,
    )(hidden, mask, w_p, b_p)

    return logits[:B, :L], probs[:B, :L]


def _reference(hidden, mask, weight, bias):
    h = hidden.astype(jnp.float32)
    m = jnp.where(mask < 0.0, 0.0, mask.astype(jnp.float32))[..., None]
    summed = jnp.sum(h * m, axis=1)
    denom = jnp.maximum(jnp.sum(m, axis=1), 1e-9)
    pooled = summed / denom
    logits = pooled @ weight + bias
    probs = jax.nn.softmax(logits, axis=-1)
    return logits, probs


if __name__ == "__main__":
    # Small shapes consistent with the forward pass:
    #   batch B=2, seq S=8, hidden H=32, one task with L=4 labels.
    B, S, H, L = 2, 8, 32, 4

    key = jax.random.PRNGKey(0)
    k_h, k_w, k_b = jax.random.split(key, 3)

    # "pretrained" encoder output (last hidden state), stored bf16 in HBM
    # (halves the DMA bytes of the bandwidth-bound pooling pass).
    hidden = jax.random.normal(k_h, (B, S, H), dtype=jnp.float32).astype(jnp.bfloat16)

    # Attention mask containing some -1 entries (the module clamps them to 0).
    mask = jnp.array([[1, 1, 1, 1, 1, 0, -1, -1],
                      [1, 1, 1, 0, -1, -1, -1, -1]], dtype=jnp.float32)

    # Deterministic classifier parameters (nn.Linear(hidden_size, num_labels)).
    weight = jax.random.normal(k_w, (H, L), dtype=jnp.float32) * 0.1
    bias = jax.random.normal(k_b, (L,), dtype=jnp.float32) * 0.1

    logits, probs = clas_head(hidden, mask, weight, bias)
    jax.block_until_ready((logits, probs))

    ref_logits, ref_probs = _reference(hidden, mask, weight, bias)
    assert jnp.allclose(logits, ref_logits, atol=1e-5, rtol=1e-5), "logits mismatch"
    assert jnp.allclose(probs, ref_probs, atol=1e-5, rtol=1e-5), "probs mismatch"

    # TODO(synk): FocalLoss / BCEFocalLoss (training path) and the HF `pretrained`
    # transformer itself are external to this kernel and not reimplemented here.
    print("KERNEL_OK")
</pallas_src>

<mosaic_0001>
module attributes {stable_mosaic.version = 11 : i64} {
  func.func @_clas_head_kernel(%arg0: i32, %arg1: i32, %arg2: memref<2x8x32xbf16, #tpu.memory_space<vmem>>, %arg3: memref<2x8xf32, #tpu.memory_space<vmem>>, %arg4: memref<32x128xf32, #tpu.memory_space<vmem>>, %arg5: memref<1x128xf32, #tpu.memory_space<vmem>>, %arg6: memref<2x128xf32, #tpu.memory_space<vmem>>, %arg7: memref<2x128xf32, #tpu.memory_space<vmem>>, %arg8: memref<2x32xf32, #tpu.memory_space<vmem>>, %arg9: memref<2x1xf32, #tpu.memory_space<vmem>>) attributes {dimension_semantics = [#tpu.dimension_semantics<parallel>, #tpu.dimension_semantics<arbitrary>], iteration_bounds = array<i64: 1, 1>, scalar_prefetch = 0 : i64, scratch_operands = 2 : i64, tpu.core_type = #tpu.core_type<tc>, window_params = [{transform_indices = @transform_0, window_bounds = array<i64: 2, 8, 32>}, {transform_indices = @transform_1, window_bounds = array<i64: 2, 8>}, {pipeline_mode = #tpu.pipeline_mode<synchronous>, transform_indices = @transform_2, window_bounds = array<i64: 32, 128>}, {pipeline_mode = #tpu.pipeline_mode<synchronous>, transform_indices = @transform_3, window_bounds = array<i64: 1, 128>}, {transform_indices = @transform_4, window_bounds = array<i64: 2, 128>}, {transform_indices = @transform_5, window_bounds = array<i64: 2, 128>}]} {
    %c0_i32 = arith.constant 0 : i32
    %0 = arith.cmpi eq, %arg1, %c0_i32 : i32
    %1 = arith.extui %0 : i1 to i32
    %c0_i32_0 = arith.constant 0 : i32
    %2 = arith.cmpi ne, %1, %c0_i32_0 : i32
    scf.if %2 {
      %cst_18 = arith.constant 0.000000e+00 : f32
      %25 = vector.broadcast %cst_18 : f32 to vector<2x32xf32>
      %c0_19 = arith.constant 0 : index
      %c0_20 = arith.constant 0 : index
      %26 = vector.load %arg8[%c0_19, %c0_20] : memref<2x32xf32, #tpu.memory_space<vmem>>, vector<2x32xf32>
      tpu.vector_store %arg8[%c0_19, %c0_20], %25 {strides = array<i32>} : memref<2x32xf32, #tpu.memory_space<vmem>>, vector<2x32xf32>,
      %cst_21 = arith.constant 0.000000e+00 : f32
      %27 = vector.broadcast %cst_21 : f32 to vector<2x1xf32>
      %c0_22 = arith.constant 0 : index
      %c0_23 = arith.constant 0 : index
      %28 = vector.load %arg9[%c0_22, %c0_23] : memref<2x1xf32, #tpu.memory_space<vmem>>, vector<2x1xf32>
      tpu.vector_store %arg9[%c0_22, %c0_23], %27 {strides = array<i32>} : memref<2x1xf32, #tpu.memory_space<vmem>>, vector<2x1xf32>,
    } else {
    }
    %c0 = arith.constant 0 : index
    %c0_1 = arith.constant 0 : index
    %3 = vector.load %arg3[%c0, %c0_1] : memref<2x8xf32, #tpu.memory_space<vmem>>, vector<2x8xf32>
    %cst = arith.constant 0.000000e+00 : f32
    %4 = vector.broadcast %cst : f32 to vector<2x8xf32>
    %5 = arith.cmpf olt, %3, %4 : vector<2x8xf32>
    %cst_2 = arith.constant 0.000000e+00 : f32
    %6 = vector.broadcast %cst_2 : f32 to vector<2x8xf32>
    %7 = arith.select %5, %6, %3 : vector<2x8xi1>, vector<2x8xf32>
    %c0_3 = arith.constant 0 : index
    %c0_4 = arith.constant 0 : index
    %c0_5 = arith.constant 0 : index
    %8 = vector.load %arg2[%c0_3, %c0_4, %c0_5] : memref<2x8x32xbf16, #tpu.memory_space<vmem>>, vector<2x8x32xbf16>
    %9 = arith.extf %8 : vector<2x8x32xbf16> to vector<2x8x32xf32>
    %c0_6 = arith.constant 0 : index
    %c0_7 = arith.constant 0 : index
    %10 = vector.load %arg8[%c0_6, %c0_7] : memref<2x32xf32, #tpu.memory_space<vmem>>, vector<2x32xf32>
    %11 = vector.shape_cast %7 : vector<2x8xf32> to vector<2x8x1xf32>
    %12 = vector.broadcast %11 : vector<2x8x1xf32> to vector<2x8x32xf32>
    %13 = arith.mulf %9, %12 : vector<2x8x32xf32>
    %cst_8 = arith.constant dense<0.000000e+00> : vector<2x32xf32>
    %14 = vector.multi_reduction <add>, %13, %cst_8 [1] : vector<2x8x32xf32> to vector<2x32xf32>
    %15 = arith.addf %10, %14 : vector<2x32xf32>
    %c0_9 = arith.constant 0 : index
    %c0_10 = arith.constant 0 : index
    %16 = vector.load %arg8[%c0_9, %c0_10] : memref<2x32xf32, #tpu.memory_space<vmem>>, vector<2x32xf32>
    tpu.vector_store %arg8[%c0_9, %c0_10], %15 {strides = array<i32>} : memref<2x32xf32, #tpu.memory_space<vmem>>, vector<2x32xf32>,
    %c0_11 = arith.constant 0 : index
    %c0_12 = arith.constant 0 : index
    %17 = vector.load %arg9[%c0_11, %c0_12] : memref<2x1xf32, #tpu.memory_space<vmem>>, vector<2x1xf32>
    %cst_13 = arith.constant dense<0.000000e+00> : vector<2xf32>
    %18 = vector.multi_reduction <add>, %7, %cst_13 [1] : vector<2x8xf32> to vector<2xf32>
    %19 = vector.shape_cast %18 : vector<2xf32> to vector<2x1xf32>
    %20 = arith.addf %17, %19 : vector<2x1xf32>
    %c0_14 = arith.constant 0 : index
    %c0_15 = arith.constant 0 : index
    %21 = vector.load %arg9[%c0_14, %c0_15] : memref<2x1xf32, #tpu.memory_space<vmem>>, vector<2x1xf32>
    tpu.vector_store %arg9[%c0_14, %c0_15], %20 {strides = array<i32>} : memref<2x1xf32, #tpu.memory_space<vmem>>, vector<2x1xf32>,
    %c0_i32_16 = arith.constant 0 : i32
    %22 = arith.cmpi eq, %arg1, %c0_i32_16 : i32
    %23 = arith.extui %22 : i1 to i32
    %c0_i32_17 = arith.constant 0 : i32
    %24 = arith.cmpi ne, %23, %c0_i32_17 : i32
    scf.if %24 {
      %c0_18 = arith.constant 0 : index
      %c0_19 = arith.constant 0 : index
      %25 = vector.load %arg8[%c0_18, %c0_19] : memref<2x32xf32, #tpu.memory_space<vmem>>, vector<2x32xf32>
      %c0_20 = arith.constant 0 : index
      %c0_21 = arith.constant 0 : index
      %26 = vector.load %arg9[%c0_20, %c0_21] : memref<2x1xf32, #tpu.memory_space<vmem>>, vector<2x1xf32>
      %cst_22 = arith.constant 9.99999971E-10 : f32
      %27 = vector.broadcast %cst_22 : f32 to vector<2x1xf32>
      %28 = arith.maximumf %26, %27 : vector<2x1xf32>
      %29 = vector.broadcast %28 : vector<2x1xf32> to vector<2x32xf32>
      %30 = arith.divf %25, %29 : vector<2x32xf32>
      %c0_23 = arith.constant 0 : index
      %c0_24 = arith.constant 0 : index
      %31 = vector.load %arg4[%c0_23, %c0_24] : memref<32x128xf32, #tpu.memory_space<vmem>>, vector<32x128xf32>
      %cst_25 = arith.constant dense<0.000000e+00> : vector<2x128xf32>
      %32 = tpu.matmul %30, %31, %cst_25 {dimension_numbers = #tpu.dot_dimension_numbers<[1], [0], [0], [1], [0, 0, 1, 1], [], []>} : vector<2x32xf32>, vector<32x128xf32>, vector<2x128xf32> -> vector<2x128xf32>
      %c0_26 = arith.constant 0 : index
      %c0_27 = arith.constant 0 : index
      %33 = vector.load %arg5[%c0_26, %c0_27] : memref<1x128xf32, #tpu.memory_space<vmem>>, vector<1x128xf32>
      %34 = vector.broadcast %33 : vector<1x128xf32> to vector<2x128xf32>
      %35 = arith.addf %32, %34 : vector<2x128xf32>
      %c0_28 = arith.constant 0 : index
      %c0_29 = arith.constant 0 : index
      %36 = vector.load %arg6[%c0_28, %c0_29] : memref<2x128xf32, #tpu.memory_space<vmem>>, vector<2x128xf32>
      tpu.vector_store %arg6[%c0_28, %c0_29], %35 {strides = array<i32>} : memref<2x128xf32, #tpu.memory_space<vmem>>, vector<2x128xf32>,
      %cst_30 = arith.constant dense<0xFF800000> : vector<2xf32>
      %37 = vector.multi_reduction <maximumf>, %35, %cst_30 [1] : vector<2x128xf32> to vector<2xf32>
      %38 = vector.shape_cast %37 : vector<2xf32> to vector<2x1xf32>
      %39 = vector.broadcast %38 : vector<2x1xf32> to vector<2x128xf32>
      %40 = arith.subf %35, %39 : vector<2x128xf32>
      %41 = math.exp %40 : vector<2x128xf32>
      %cst_31 = arith.constant dense<0.000000e+00> : vector<2xf32>
      %42 = vector.multi_reduction <add>, %41, %cst_31 [1] : vector<2x128xf32> to vector<2xf32>
      %43 = vector.shape_cast %42 : vector<2xf32> to vector<2x1xf32>
      %44 = vector.broadcast %43 : vector<2x1xf32> to vector<2x128xf32>
      %45 = arith.divf %41, %44 : vector<2x128xf32>
      %c0_32 = arith.constant 0 : index
      %c0_33 = arith.constant 0 : index
      %46 = vector.load %arg7[%c0_32, %c0_33] : memref<2x128xf32, #tpu.memory_space<vmem>>, vector<2x128xf32>
      tpu.vector_store %arg7[%c0_32, %c0_33], %45 {strides = array<i32>} : memref<2x128xf32, #tpu.memory_space<vmem>>, vector<2x128xf32>,
    } else {
    }
    return
  }
  func.func @transform_0(%arg0: i32, %arg1: i32) -> (i32, i32, i32) {
    %c0_i32 = arith.constant 0 : i32
    %c0_i32_0 = arith.constant 0 : i32
    return %arg0, %arg1, %c0_i32 : i32, i32, i32
  }
  func.func @transform_1(%arg0: i32, %arg1: i32) -> (i32, i32) {
    %c0_i32 = arith.constant 0 : i32
    return %arg0, %arg1 : i32, i32
  }
  func.func @transform_2(%arg0: i32, %arg1: i32) -> (i32, i32) {
    %c0_i32 = arith.constant 0 : i32
    %c0_i32_0 = arith.constant 0 : i32
    %c0_i32_1 = arith.constant 0 : i32
    return %c0_i32, %c0_i32_0 : i32, i32
  }
  func.func @transform_3(%arg0: i32, %arg1: i32) -> (i32, i32) {
    %c0_i32 = arith.constant 0 : i32
    %c0_i32_0 = arith.constant 0 : i32
    %c0_i32_1 = arith.constant 0 : i32
    return %c0_i32, %c0_i32_0 : i32, i32
  }
  func.func @transform_4(%arg0: i32, %arg1: i32) -> (i32, i32) {
    %c0_i32 = arith.constant 0 : i32
    %c0_i32_0 = arith.constant 0 : i32
    return %arg0, %c0_i32 : i32, i32
  }
  func.func @transform_5(%arg0: i32, %arg1: i32) -> (i32, i32) {
    %c0_i32 = arith.constant 0 : i32
    %c0_i32_0 = arith.constant 0 : i32
    return %arg0, %c0_i32 : i32, i32
  }
}

</mosaic_0001>

<llo_original>
// kernel: tpu_custom_call.1
$region0: #{tpu_custom_call.1}
  #allocation0 [shape = 'u32[]', space=smem, size = 0x4, offset = 0x4, fixed_abs, tag = 'smem constant byte address 0x4 - core index']
  #allocation1 [shape = 'u32[72,128]{1,0:T(1,128)}', space=vmem, size = 0x9000, scoped, tag = 'internal scratch']
  #allocation2 [shape = 'f32[2,32]{1,0:T(2,128)}', space=vmem, size = 0x400, scoped, tag = 'scratch operand']
  #allocation3 [shape = 'f32[2,1]{1,0:T(2,128)}', space=vmem, size = 0x400, scoped, tag = 'scratch operand']
  %s0 = inlined_call_operand.hbm [shape: bf16[2,8,32], index: 0, kind: input, shape index: {}]
  %s1 = inlined_call_operand.hbm [shape: f32[2,8], index: 1, kind: input, shape index: {}]
  %s2 = inlined_call_operand.hbm [shape: f32[32,128], index: 2, kind: input, shape index: {}]
  %s3 = inlined_call_operand.vmem [shape: f32[1,128], index: 3, kind: input, shape index: {}]
  %s4 = inlined_call_operand.hbm [shape: f32[2,128], index: 4, kind: output, shape index: {0}]
  %s5 = inlined_call_operand.hbm [shape: f32[2,128], index: 5, kind: output, shape index: {1}]
  %6 = xla_tuple %s4, %s5
  %s7 = sld [smem:[#allocation0]]
  $region54: #{tpu_custom_call.1} parent=0
    _
  %s9 = ssub.s32 1, %s7
  %s10 = scalar_select 0, %s9, %s7
  $region1: #{tpu_custom_call.1} parent=0
    #allocation4 [shape = 'u8[4096]{0}', space=vmem, size = 0x1000, scoped, tag = 'input window, operand 0, single buffered']
    #allocation5 [shape = 's32[1]{0}', space=sflag, size = 0x4, scoped, tag = 'scoped memory for tpu_custom_call.1']
    #allocation6 [shape = 's32[1]{0}', space=sflag, size = 0x4, scoped, tag = 'scoped memory for tpu_custom_call.1']
    #allocation7 [shape = 'u8[1024]{0}', space=vmem, size = 0x400, scoped, tag = 'input window, operand 1, single buffered']
    #allocation8 [shape = 's32[1]{0}', space=sflag, size = 0x4, scoped, tag = 'scoped memory for tpu_custom_call.1']
    #allocation9 [shape = 'u8[16384]{0}', space=vmem, size = 0x4000, scoped, tag = 'input window, operand 2, single buffered']
    #allocation10 [shape = 'u8[1024]{0}', space=vmem, size = 0x400, scoped, tag = 'output window, operand 0, single buffered']
    #allocation11 [shape = 'u8[1024]{0}', space=vmem, size = 0x400, scoped, tag = 'output window, operand 1, single buffered']
    #allocation12 [shape = 's32[1]{0}', space=sflag, size = 0x4, scoped, tag = 'scoped memory for tpu_custom_call.1']
    %11 = vsyncpa [#allocation5], 0
    %12 = vsyncpa [#allocation8], 0
    %13 = vsyncpa [#allocation6], 0
    %14 = vsyncpa [#allocation12], 0
    // Predicated region
    $region2: #{tpu_custom_call.1} parent=1 // pred_check
      _
    $region3: #{tpu_custom_call.1} parent=1 // pred_check_branch
      %16 = sbr.rel (0) target = $region5
    $region4: #{tpu_custom_call.1} parent=1 // pred_region
      %18 = vsyncadd [#allocation5], 0
      %s19 = sshll.u32 %s0, 4
      %s20 = int_to_ptr.hbm [resolvable:$true] %s19
      %s21 = sshll.u32 [#allocation4], 4
      %s22 = int_to_ptr.vmem [resolvable:$true] %s21
      %27 = dma.hbm_to_vmem [thread:$0]  %s20, 128, %s22, [#allocation5], 64, 64, 4
    $region5: #{tpu_custom_call.1} parent=1 // pred_fallthru
      _
    // Predicated region
    $region6: #{tpu_custom_call.1} parent=1 // pred_check
      _
    $region7: #{tpu_custom_call.1} parent=1 // pred_check_branch
      %29 = sbr.rel (0) target = $region9
    $region8: #{tpu_custom_call.1} parent=1 // pred_region
      %31 = vsyncadd [#allocation8], 0
      %s33 = sshll.u32 %s1, 4
      %s34 = int_to_ptr.hbm [resolvable:$true] %s33
      %s35 = sshll.u32 [#allocation7], 4
      %s36 = int_to_ptr.vmem [resolvable:$true] %s35
      %38 = dma.hbm_to_vmem [thread:$0]  %s34, 32, %s36, [#allocation8]
    $region9: #{tpu_custom_call.1} parent=1 // pred_fallthru
      _
    // Predicated region
    $region10: #{tpu_custom_call.1} parent=1 // pred_check
      _
    $region11: #{tpu_custom_call.1} parent=1 // pred_check_branch
      %40 = sbr.rel (0) target = $region13
    $region12: #{tpu_custom_call.1} parent=1 // pred_region
      %42 = vsyncadd [#allocation8], 0
      %s43 = sshll.u32 %s2, 4
      %s44 = int_to_ptr.hbm [resolvable:$true] %s43
      %s45 = sshll.u32 [#allocation9], 4
      %s46 = int_to_ptr.vmem [resolvable:$true] %s45
      %51 = dma.hbm_to_vmem [thread:$0]  %s44, 512, %s46, [#allocation8], 128, 128, 8
    $region13: #{tpu_custom_call.1} parent=1 // pred_fallthru
      _
    // Predicated region
    $region14: #{tpu_custom_call.1} parent=1 // pred_check
      _
    $region15: #{tpu_custom_call.1} parent=1 // pred_check_branch
      %53 = sbr.rel (0) target = $region17
    $region16: #{tpu_custom_call.1} parent=1 // pred_region
      _
    $region17: #{tpu_custom_call.1} parent=1 // pred_fallthru
      _
    // Predicated region
    $region18: #{tpu_custom_call.1} parent=1 // pred_check
      _
    $region19: #{tpu_custom_call.1} parent=1 // pred_check_branch
      %55 = sbr.rel (0) target = $region21
    $region20: #{tpu_custom_call.1} parent=1 // pred_region
      %57 = dma.done [#allocation5], 128
    $region21: #{tpu_custom_call.1} parent=1 // pred_fallthru
      _
    // Predicated region
    $region22: #{tpu_custom_call.1} parent=1 // pred_check
      _
    $region23: #{tpu_custom_call.1} parent=1 // pred_check_branch
      %59 = sbr.rel (0) target = $region25
    $region24: #{tpu_custom_call.1} parent=1 // pred_region
      %61 = dma.done [#allocation8], 32
    $region25: #{tpu_custom_call.1} parent=1 // pred_fallthru
      _
    // Predicated region
    $region26: #{tpu_custom_call.1} parent=1 // pred_check
      _
    $region27: #{tpu_custom_call.1} parent=1 // pred_check_branch
      %63 = sbr.rel (0) target = $region29
    $region28: #{tpu_custom_call.1} parent=1 // pred_region
      %65 = dma.done [#allocation8], 512
    $region29: #{tpu_custom_call.1} parent=1 // pred_fallthru
      _
    %p66 = scmp.eq.s32.totalorder 0, 0
    // Predicated region
    $region30: #{tpu_custom_call.1} parent=1 // pred_check
      %p67 = pneg %p66
    $region31: #{tpu_custom_call.1} parent=1 // pred_check_branch
      %69 = sbr.rel (%p67) target = $region33
    $region32: #{tpu_custom_call.1} parent=1 // pred_region
      %vm70 = vcmask 254976
      %71 = vst.msk [vmem:[#allocation2] sm:$0x3] %vm70, 0.0
      %vm72 = vcmask 1024
      %73 = vst.msk [vmem:[#allocation3] sm:$0x3] %vm72, 0.0
    $region33: #{tpu_custom_call.1} parent=1 // pred_fallthru
      _
    %v74 = vld [vmem:[#allocation7] sm:$0x3]
    %vm75 = vcmp.lt.f32.partialorder %v74, 0.0
    %v76 = vsel %vm75, 0.0, %v74
    %v77 = vld [vmem:[#allocation4] sm:$0xf]
    %v78 = vld [vmem:[#allocation4 + $0x4] sm:$0xf]
    %v79 = vunpack.c.l.bf16 %v77
    %v80 = vunpack.c.l.bf16 %v78
    %v81 = vld [vmem:[#allocation2] sm:$0x3]
    %v82 = vperm.slane %v76, 0
    %v83 = vlaneseq
    %v84 = vshrl.u32 %v83, 7
    %86 = vset.pattern.permute.xlu0 %v84
    %87 = vperm.xlu0 %86, %v82
    %v88 = vpop.permute.xlu0 %87
    %v89 = vperm.slane %v76, 1
    %v90 = vlaneseq
    %v91 = vshrl.u32 %v90, 7
    %93 = vset.pattern.permute.xlu0 %v91
    %94 = vperm.xlu0 %93, %v89
    %v95 = vpop.permute.xlu0 %94
    %v96 = vmul.f32 %v79, %v88
    %v97 = vmul.f32 %v80, %v95
    %vm98 = vcmask 261120
    %v99 = vsel %vm98, %v96, 0.0
    %v100 = vrot.slane %v99, 4
    %v101 = vadd.f32 %v99, %v100
    %v102 = vrot.slane %v101, 2
    %v103 = vadd.f32 %v101, %v102
    %v104 = vrot.slane %v103, 1
    %v105 = vadd.f32 %v103, %v104
    %v106 = vsel %vm98, %v97, 0.0
    %v107 = vrot.slane %v106, 4
    %v108 = vadd.f32 %v106, %v107
    %v109 = vrot.slane %v108, 2
    %v110 = vadd.f32 %v108, %v109
    %v111 = vrot.slane %v110, 1
    %v112 = vadd.f32 %v110, %v111
    %vm115 = vcmask 1041409
    %v116 = vsel %vm115, %v112, %v105
    %v118 = vadd.f32 %v81, %v116
    %vm119 = vcmask 254976
    %120 = vst.msk [vmem:[#allocation2] sm:$0x3] %vm119, %v118
    %v121 = vld [vmem:[#allocation3] sm:$0x3]
    %vm122 = vcmask 58368
    %v123 = vsel %vm122, %v76, 0.0
    %124 = vadd.xlane.f32.xlu0 %v123
    %v125 = vpop.xlane.xlu0 %124
    %v126 = vadd.f32 %v121, %v125
    %vm127 = vcmask 1024
    %128 = vst.msk [vmem:[#allocation3] sm:$0x3] %vm127, %v126
    // Predicated region
    $region34: #{tpu_custom_call.1} parent=1 // pred_check
      %p129 = pneg %p66
    $region35: #{tpu_custom_call.1} parent=1 // pred_check_branch
      %131 = sbr.rel (%p129) target = $region37
    $region36: #{tpu_custom_call.1} parent=1 // pred_region
      %v132 = vld [vmem:[#allocation2] sm:$0x3]
      %v133 = vld [vmem:[#allocation3] sm:$0x3]
      %v134 = vmax.f32 %v133, 1e-09
      %136 = vset.pattern.permute.xlu0 0
      %137 = vperm.xlu0 %136, %v134
      %v138 = vpop.permute.xlu0 %137
      %v140 = vrcp.pop %v138
      %v141 = vmul.f32 %v138, %v140
      %v142 = vsub.f32 1.0, %v141
      %v143 = vmul.f32 %v140, %v142
      %v144 = vadd.f32 %v140, %v143
      %vm145 = vweird.f32 %v138
      %vm146 = vweird.f32 %v140
      %vm147 = vmor %vm145, %vm146
      %v148 = vsel %vm147, %v140, %v144
      %v149 = vand.u32 2147483647, %v138
      %vm150 = vcmp.eq.f32.partialorder %v149, 8.507059e+37
      %v151 = vand.u32 %v138, 2147483648
      %v152 = vor.u32 1.1754944e-38, %v151
      %v153 = vsel %vm150, %v152, %v148
      %v154 = vmul.f32 %v132, %v153
      %v155 = vld [vmem:[#allocation9] sm:$0xff]
      %v156 = vld [vmem:[#allocation9 + $0x8] sm:$0xff]
      %v157 = vld [vmem:[#allocation9 + $0x10] sm:$0xff]
      %v158 = vld [vmem:[#allocation9 + $0x18] sm:$0xff]
      %v159 = vld [vmem:[%s3] sm:$0x1]
      %v161 = vperm.slane %v159, 0
      %v164 = vsel %vm98, %v154, 0
      %166 = vmatpush.msra.mxu0 0.0
      %167 = vmatpush.msra.mxu0 0.0
      %168 = vmatpush.msra.mxu0 0.0
      %169 = vmatpush.msra.mxu0 0.0
      %170 = vmatpush.msra.mxu0 0.0
      %171 = vmatpush.msra.mxu0 0.0
      %172 = vmatpush.msra.mxu0 0.0
      %173 = vmatpush.msra.mxu0 0.0
      %174 = vmatpush.msra.mxu0 0.0
      %175 = vmatpush.msra.mxu0 0.0
      %176 = vmatpush.msra.mxu0 0.0
      %177 = vmatpush.msra.mxu0 0.0
      %178 = vmatpush.msra.mxu0 %v158
      %179 = vmatpush.msra.mxu0 %v157
      %180 = vmatpush.msra.mxu0 %v156
      %181 = vmatpush.msra.mxu0 %v155
      %182 = vmatmul.f32.gmra.mxu0 %v164
      %v183 = vpop.f32.mrf.mxu0
      %v184 = vadd.f32 %v161, %v183
      %185 = vdwg.mxu0
      %186 = vst [vmem:[#allocation10] sm:$0x3] %v184
      %vm187 = vcmask 1041408
      %v188 = vsel %vm187, %v184, -inf
      %189 = vmax.xlane.f32.xlu0 %v188
      %v190 = vpop.xlane.xlu0 %189
      %v191 = vsub.f32 %v184, %v190
      %v192 = vmul.f32 %v191, 1.442695
      %v193 = vpow.pop %v192
      %v194 = vsel %vm187, %v193, 0.0
      %195 = vadd.xlane.f32.xlu0 %v194
      %v196 = vpop.xlane.xlu0 %195
      %v197 = vrcp.pop %v196
      %v198 = vmul.f32 %v196, %v197
      %v199 = vsub.f32 1.0, %v198
      %v200 = vmul.f32 %v197, %v199
      %v201 = vadd.f32 %v197, %v200
      %vm202 = vweird.f32 %v196
      %vm203 = vweird.f32 %v197
      %vm204 = vmor %vm202, %vm203
      %v205 = vsel %vm204, %v197, %v201
      %v206 = vand.u32 2147483647, %v196
      %vm207 = vcmp.eq.f32.partialorder %v206, 8.507059e+37
      %v208 = vand.u32 %v196, 2147483648
      %v209 = vor.u32 1.1754944e-38, %v208
      %v210 = vsel %vm207, %v209, %v205
      %v211 = vmul.f32 %v193, %v210
      %212 = vst [vmem:[#allocation11] sm:$0x3] %v211
    $region37: #{tpu_custom_call.1} parent=1 // pred_fallthru
      _
    // Predicated region
    $region38: #{tpu_custom_call.1} parent=1 // pred_check
      _
    $region39: #{tpu_custom_call.1} parent=1 // pred_check_branch
      %214 = sbr.rel (0) target = $region41
    $region40: #{tpu_custom_call.1} parent=1 // pred_region
      %216 = vsyncadd [#allocation6], 0
      %s218 = sshll.u32 [#allocation10], 4
      %s219 = int_to_ptr.vmem [resolvable:$true] %s218
      %s220 = sshll.u32 %s4, 4
      %s221 = int_to_ptr.hbm [resolvable:$true] %s220
      %223 = dma.vmem_to_hbm [thread:$0]  %s219, 32, %s221, [#allocation6]
    $region41: #{tpu_custom_call.1} parent=1 // pred_fallthru
      _
    // Predicated region
    $region42: #{tpu_custom_call.1} parent=1 // pred_check
      _
    $region43: #{tpu_custom_call.1} parent=1 // pred_check_branch
      %225 = sbr.rel (0) target = $region45
    $region44: #{tpu_custom_call.1} parent=1 // pred_region
      %227 = vsyncadd [#allocation12], 0
      %s229 = sshll.u32 [#allocation11], 4
      %s230 = int_to_ptr.vmem [resolvable:$true] %s229
      %s231 = sshll.u32 %s5, 4
      %s232 = int_to_ptr.hbm [resolvable:$true] %s231
      %234 = dma.vmem_to_hbm [thread:$0]  %s230, 32, %s232, [#allocation12]
    $region45: #{tpu_custom_call.1} parent=1 // pred_fallthru
      _
    // Predicated region
    $region46: #{tpu_custom_call.1} parent=1 // pred_check
      _
    $region47: #{tpu_custom_call.1} parent=1 // pred_check_branch
      %236 = sbr.rel (0) target = $region49
    $region48: #{tpu_custom_call.1} parent=1 // pred_region
      %238 = dma.done [#allocation6], 32
    $region49: #{tpu_custom_call.1} parent=1 // pred_fallthru
      _
    // Predicated region
    $region50: #{tpu_custom_call.1} parent=1 // pred_check
      _
    $region51: #{tpu_custom_call.1} parent=1 // pred_check_branch
      %240 = sbr.rel (0) target = $region53
    $region52: #{tpu_custom_call.1} parent=1 // pred_region
      %242 = dma.done [#allocation12], 32
    $region53: #{tpu_custom_call.1} parent=1 // pred_fallthru
      _
    %243 = vsyncpa [#allocation5], 1
    %244 = vsyncpa [#allocation8], 1
    %245 = vsyncpa [#allocation6], 1
    %246 = vsyncpa [#allocation12], 1

</llo_original>
